<compile_context>
chip_gen: v7x
topology: tpu7x:2x2x1
jax: 0.10.0
libtpu: 0.0.40
codegen_flags: <defaults>
</compile_context>

<pallas_src>
import math
import jax
import jax.numpy as jnp
from jax.experimental import pallas as pl
from jax.experimental.pallas import tpu as pltpu

LANE = 128
TARGET_TILE_BYTES = 2 * 1024 * 1024   # ~2 MiB per x buffer: >=85% of HBM
                                      # roofline on v6e, safe on v5e, good on v7x.


def _drop_path_kernel(scale_ref, x_ref, o_ref):
    # scale_ref: (tile_r, 1) float32 per-row scale = mask_b / keep_prob
    # x_ref / o_ref: (tile_r, 128) tile of the flattened batch
    o_ref[...] = (x_ref[...].astype(jnp.float32) * scale_ref[...]).astype(o_ref.dtype)


def drop_path_pallas(x, key, drop_prob: float = 0.0, training: bool = False):
    """Exact semantics of the PyTorch `drop_path`:
         if drop_prob == 0 or not training: identity
         else: out = x / keep_prob * floor(keep_prob + U[0,1))   (per sample)
    """
    if drop_prob == 0.0 or not training:
        return x

    keep_prob = 1.0 - drop_prob
    orig_shape = x.shape
    b = orig_shape[0]
    n = math.prod(orig_shape[1:])

    itemsize = jnp.dtype(x.dtype).itemsize
    pack = max(8, 32 // itemsize)          # sublane packing: 8 f32 / 16 bf16 / 32 i8

    # Pad each sample only to a LANE multiple (no-op when n % 128 == 0, which is
    # the common transformer case), so every 128-wide row belongs to exactly
    # one sample and the per-row scale is well defined.
    n_pad = ((n + LANE - 1) // LANE) * LANE
    rows_per_sample = n_pad // LANE
    total_rows = b * rows_per_sample

    xf = x.reshape(b, n)
    if n_pad != n:
        xf = jnp.pad(xf, ((0, 0), (0, n_pad - n)))
    x2d = xf.reshape(total_rows, LANE)

    # Per-sample scale in f32 (hoists the floor + 1/keep_prob out of the
    # kernel), expanded to one value per 128-wide row.
    u = jax.random.uniform(key, (b,), dtype=jnp.float32)
    mask = jnp.floor(keep_prob + u)
    scale = mask * (1.0 / keep_prob)
    scale_rows = jnp.repeat(scale, rows_per_sample).reshape(total_rows, 1)

    # Row-tile sizing: ~2 MiB per x buffer, sublane-pack aligned. If the whole
    # slab is smaller than one target tile, use a single full-extent block
    # (block == full dim is always a legal BlockSpec shape).
    target_rows = max(pack, (TARGET_TILE_BYTES // (LANE * itemsize)) // pack * pack)
    if total_rows <= target_rows:
        tile_r = total_rows
    else:
        tile_r = target_rows                # multiple of pack; partial edge tile OK
    num_r = pl.cdiv(total_rows, tile_r)

    out2d = pl.pallas_call(
        _drop_path_kernel,
        out_shape=jax.ShapeDtypeStruct((total_rows, LANE), x.dtype),
        grid=(num_r,),
        in_specs=[
            pl.BlockSpec((tile_r, 1), lambda r: (r, 0)),      # per-row scale
            pl.BlockSpec((tile_r, LANE), lambda r: (r, 0)),   # x tile
        ],
        out_specs=pl.BlockSpec((tile_r, LANE), lambda r: (r, 0)),
        compiler_params=pltpu.CompilerParams(
            dimension_semantics=("parallel",),
            vmem_limit_bytes=32 * 1024 * 1024,
        ),
    )(scale_rows, x2d)

    out = out2d.reshape(b, n_pad)
    if n_pad != n:
        out = out[:, :n]
    return out.reshape(orig_shape)


def _reference(x, key, drop_prob):
    keep_prob = 1.0 - drop_prob
    b = x.shape[0]
    u = jax.random.uniform(key, (b,), dtype=jnp.float32)
    mask = jnp.floor(keep_prob + u).astype(x.dtype)
    mask = mask.reshape((b,) + (1,) * (x.ndim - 1))
    return x / keep_prob * mask


if __name__ == "__main__":
    key = jax.random.PRNGKey(0)
    kx, kmask, kx2, kmask2 = jax.random.split(key, 4)
    drop_prob = 0.2

    # Shape consistent with ViT residual-branch activations (NCHW).
    x = jax.random.normal(kx, (2, 4, 16, 16), dtype=jnp.float32)

    # training=True path (the only path with real compute)
    out = drop_path_pallas(x, kmask, drop_prob=drop_prob, training=True)
    out = jax.block_until_ready(out)
    ref = _reference(x, kmask, drop_prob)
    assert jnp.allclose(out, ref, atol=1e-6), "mismatch vs reference"

    # ragged / padding path: per-sample size not a multiple of 128
    x2 = jax.random.normal(kx2, (2, 3, 10, 10), dtype=jnp.float32)
    out2 = drop_path_pallas(x2, kmask2, drop_prob=drop_prob, training=True)
    out2 = jax.block_until_ready(out2)
    ref2 = _reference(x2, kmask2, drop_prob)
    assert jnp.allclose(out2, ref2, atol=1e-6), "mismatch vs reference (padded)"

    # eval-mode / drop_prob=0 path is identity
    out_eval = drop_path_pallas(x, kmask, drop_prob=drop_prob, training=False)
    assert jnp.array_equal(jax.block_until_ready(out_eval), x)
    out_p0 = drop_path_pallas(x, kmask, drop_prob=0.0, training=True)
    assert jnp.array_equal(jax.block_until_ready(out_p0), x)

    print("KERNEL_OK")
</pallas_src>

<mosaic_0001>
module attributes {stable_mosaic.version = 11 : i64} {
  func.func @_drop_path_kernel(%arg0: i32, %arg1: memref<16x1xf32, #tpu.memory_space<vmem>>, %arg2: memref<16x128xf32, #tpu.memory_space<vmem>>, %arg3: memref<16x128xf32, #tpu.memory_space<vmem>>) attributes {dimension_semantics = [#tpu.dimension_semantics<parallel>], iteration_bounds = array<i64: 1>, scalar_prefetch = 0 : i64, scratch_operands = 0 : i64, tpu.core_type = #tpu.core_type<tc>, window_params = [{transform_indices = @transform_0, window_bounds = array<i64: 16, 1>}, {transform_indices = @transform_1, window_bounds = array<i64: 16, 128>}, {transform_indices = @transform_2, window_bounds = array<i64: 16, 128>}]} {
    %c0 = arith.constant 0 : index
    %c0_0 = arith.constant 0 : index
    %0 = vector.load %arg2[%c0, %c0_0] : memref<16x128xf32, #tpu.memory_space<vmem>>, vector<16x128xf32>
    %c0_1 = arith.constant 0 : index
    %c0_2 = arith.constant 0 : index
    %1 = vector.load %arg1[%c0_1, %c0_2] : memref<16x1xf32, #tpu.memory_space<vmem>>, vector<16x1xf32>
    %2 = vector.broadcast %1 : vector<16x1xf32> to vector<16x128xf32>
    %3 = arith.mulf %0, %2 : vector<16x128xf32>
    %c0_3 = arith.constant 0 : index
    %c0_4 = arith.constant 0 : index
    %4 = vector.load %arg3[%c0_3, %c0_4] : memref<16x128xf32, #tpu.memory_space<vmem>>, vector<16x128xf32>
    tpu.vector_store %arg3[%c0_3, %c0_4], %3 {strides = array<i32>} : memref<16x128xf32, #tpu.memory_space<vmem>>, vector<16x128xf32>,
    return
  }
  func.func @transform_0(%arg0: i32) -> (i32, i32) {
    %c0_i32 = arith.constant 0 : i32
    %c0_i32_0 = arith.constant 0 : i32
    return %arg0, %c0_i32 : i32, i32
  }
  func.func @transform_1(%arg0: i32) -> (i32, i32) {
    %c0_i32 = arith.constant 0 : i32
    %c0_i32_0 = arith.constant 0 : i32
    return %arg0, %c0_i32 : i32, i32
  }
  func.func @transform_2(%arg0: i32) -> (i32, i32) {
    %c0_i32 = arith.constant 0 : i32
    %c0_i32_0 = arith.constant 0 : i32
    return %arg0, %c0_i32 : i32, i32
  }
}

</mosaic_0001>

<llo_original>
// kernel: tpu_custom_call.1
$region0: #{tpu_custom_call.1}
  #allocation0 [shape = 'u32[]', space=smem, size = 0x4, offset = 0x4, fixed_abs, tag = 'smem constant byte address 0x4 - core index']
  #allocation1 [shape = 'u32[144,128]{1,0:T(1,128)}', space=vmem, size = 0x12000, scoped, tag = 'internal scratch']
  %s0 = inlined_call_operand.vmem [shape: f32[16,1], index: 0, kind: input, shape index: {}]
  %s1 = inlined_call_operand.vmem [shape: f32[16,128], index: 1, kind: input, shape index: {}]
  %s2 = inlined_call_operand.hbm [shape: f32[16,128], index: 2, kind: output, shape index: {}]
  %s3 = sld [smem:[#allocation0]]
  $region18: #{tpu_custom_call.1} parent=0
    _
  %s5 = ssub.s32 1, %s3
  %s6 = scalar_select 0, %s5, %s3
  $region1: #{tpu_custom_call.1} parent=0
    #allocation2 [shape = 'u8[8192]{0}', space=vmem, size = 0x2000, scoped, tag = 'output window, operand 0, single buffered']
    #allocation3 [shape = 's32[1]{0}', space=sflag, size = 0x4, scoped, tag = 'scoped memory for tpu_custom_call.1']
    %7 = vsyncpa [#allocation3], 0
    // Predicated region
    $region2: #{tpu_custom_call.1} parent=1 // pred_check
      _
    $region3: #{tpu_custom_call.1} parent=1 // pred_check_branch
      %9 = sbr.rel (0) target = $region5
    $region4: #{tpu_custom_call.1} parent=1 // pred_region
      _
    $region5: #{tpu_custom_call.1} parent=1 // pred_fallthru
      _
    // Predicated region
    $region6: #{tpu_custom_call.1} parent=1 // pred_check
      _
    $region7: #{tpu_custom_call.1} parent=1 // pred_check_branch
      %11 = sbr.rel (0) target = $region9
    $region8: #{tpu_custom_call.1} parent=1 // pred_region
      _
    $region9: #{tpu_custom_call.1} parent=1 // pred_fallthru
      _
    %v12 = vld [vmem:[%s1] sm:$0xff]
    %v13 = vld [vmem:[%s1 + $0x8] sm:$0xff]
    %v14 = vld [vmem:[%s0] sm:$0xff]
    %v15 = vld [vmem:[%s0 + $0x8] sm:$0xff]
    %17 = vset.pattern.permute.xlu0 0
    %18 = vperm.xlu0 %17, %v14
    %v19 = vpop.permute.xlu0 %18
    %22 = vset.pattern.permute.xlu0 0
    %23 = vperm.xlu0 %22, %v15
    %v24 = vpop.permute.xlu0 %23
    %v26 = vmul.f32 %v12, %v19
    %v27 = vmul.f32 %v13, %v24
    %28 = vst [vmem:[#allocation2] sm:$0xff] %v26
    %29 = vst [vmem:[#allocation2 + $0x8] sm:$0xff] %v27
    // Predicated region
    $region10: #{tpu_custom_call.1} parent=1 // pred_check
      _
    $region11: #{tpu_custom_call.1} parent=1 // pred_check_branch
      %31 = sbr.rel (0) target = $region13
    $region12: #{tpu_custom_call.1} parent=1 // pred_region
      %s33 = ssub.s32 256, 256
      %34 = vsyncadd [#allocation3], %s33
      %s35 = sshll.u32 [#allocation2], 4
      %s36 = int_to_ptr.vmem [resolvable:$true] %s35
      %41 = dma.vmem_to_hbm [thread:$0]  %s36, 256, %s2, [#allocation3], 128, 128, 8
    $region13: #{tpu_custom_call.1} parent=1 // pred_fallthru
      _
    // Predicated region
    $region14: #{tpu_custom_call.1} parent=1 // pred_check
      _
    $region15: #{tpu_custom_call.1} parent=1 // pred_check_branch
      %43 = sbr.rel (0) target = $region17
    $region16: #{tpu_custom_call.1} parent=1 // pred_region
      %44 = dma.done [#allocation3], 256
    $region17: #{tpu_custom_call.1} parent=1 // pred_fallthru
      _
    %45 = vsyncpa [#allocation3], 1

</llo_original>
